<compile_context>
chip_gen: v7x
topology: tpu7x:2x2x1
jax: 0.10.0
libtpu: 0.0.40
codegen_flags: <defaults>
</compile_context>

<pallas_src>
import jax
import jax.numpy as jnp
from jax import lax
from jax.experimental import pallas as pl
from jax.experimental.pallas import tpu as pltpu

EPS = 1e-5
_LANES = 128


def _round_up(v, m):
    return (v + m - 1) // m * m


def _make_conv_block_kernel(nb, seg_w, inv_count, eps):
    """Kernel over one batch-block: one im2col matmul + fused InstanceNorm + ReLU.

    nb:        batch elements in this grid step
    seg_w:     lane-padded per-batch column width (multiple of 128)
    inv_count: 1 / (real H*W)  -- padding columns are zero, so sums are exact
    """

    def kernel(cols_ref, w_ref, o_ref):
        # cols_ref: (K, nb*seg_w)   lane-dense im2col RHS (possibly bf16)
        # w_ref:    (C_out, K)      reshaped conv weights (possibly bf16)
        # o_ref:    (C_out, nb*seg_w)
        acc = jnp.dot(w_ref[...], cols_ref[...],
                      preferred_element_type=jnp.float32)      # (C_out, nb*seg_w) f32

        # InstanceNorm2d (affine=False) + ReLU per (batch element, channel).
        # Static loop; every segment slice is lane-aligned (seg_w % 128 == 0).
        for n in range(nb):
            seg = acc[:, n * seg_w:(n + 1) * seg_w]
            # Fused one-pass statistics: sum and sum-of-squares together,
            # scaled by precomputed 1/hw (padding columns are zero -> exact).
            s = jnp.sum(seg, axis=1, keepdims=True)
            ssq = jnp.sum(seg * seg, axis=1, keepdims=True)
            mean = s * inv_count
            var = jnp.maximum(ssq * inv_count - mean * mean, 0.0)
            normed = (seg - mean) * lax.rsqrt(var + eps)        # rsqrt -> EUP slot
            o_ref[:, n * seg_w:(n + 1) * seg_w] = (
                jnp.maximum(normed, 0.0).astype(o_ref.dtype))

    return kernel


def conv_block(x, w, b=None, *, padding=1, nb=None,
               compute_dtype=jnp.bfloat16):
    """Fused Conv2d(3x3, stride=1, same) + InstanceNorm2d(affine=False) + ReLU.

    x: (N, C_in, H, W), w: (C_out, C_in, KH, KW), b: (C_out,).
    `b` is accepted for API parity but intentionally unused: the following
    InstanceNorm's per-channel mean subtraction cancels it exactly (valid only
    because use_norm=True in this ConvBlock configuration).
    """
    N, c_in, H, W = x.shape
    c_out, _, KH, KW = w.shape
    assert KH == 2 * padding + 1 and KW == 2 * padding + 1, "same-conv only"
    if nb is None:
        nb = N                      # collapse the grid: one fat step by default
    assert N % nb == 0, "batch must be divisible by the batch block"

    L = H * W
    Lp = _round_up(L, _LANES)       # lane-padded per-batch segment width
    K = c_in * KH * KW

    # --- wrapper-side im2col: lane-dense (K, N*Lp) RHS, columns batch-major ---
    xp = jnp.pad(x, ((0, 0), (0, 0), (padding, padding), (padding, padding)))
    taps = [xp[:, :, kh:kh + H, kw:kw + W]
            for kh in range(KH) for kw in range(KW)]            # each (N,C,H,W)
    cols = jnp.stack(taps, axis=2)                              # (N, C, KH*KW, H, W)
    cols = cols.reshape(N, K, L)                                # rows: c*9 + kh*3 + kw
    if Lp != L:
        cols = jnp.pad(cols, ((0, 0), (0, 0), (0, Lp - L)))     # zero lane padding
    cols = cols.transpose(1, 0, 2).reshape(K, N * Lp)           # (K, N*Lp)

    # --- lane-dense weights: (C_out, K), same row ordering as cols ---
    w2 = w.reshape(c_out, K)

    if compute_dtype is not None:
        cols = cols.astype(compute_dtype)
        w2 = w2.astype(compute_dtype)

    grid_len = N // nb
    dim_sem = ("parallel",) if grid_len > 1 else ("arbitrary",)

    # VMEM budget: 2x double-buffered cols + out tiles + weights; raise the
    # scoped limit only when the v5e 16 MiB default would cap us, never above
    # v7x's 64 MiB physical VMEM.
    blk_bytes = (2 * K * nb * Lp * cols.dtype.itemsize
                 + 2 * c_out * nb * Lp * x.dtype.itemsize
                 + 2 * c_out * K * w2.dtype.itemsize)
    vmem_limit = None
    if blk_bytes > 12 * 1024 * 1024:
        vmem_limit = min(int(blk_bytes * 3 // 2), 64 * 1024 * 1024)

    cost = pl.CostEstimate(
        flops=2 * c_out * K * N * L,
        transcendentals=c_out * N,                              # one rsqrt per (n, c)
        bytes_accessed=cols.size * cols.dtype.itemsize
        + w2.size * w2.dtype.itemsize
        + c_out * N * Lp * x.dtype.itemsize,
    )

    out_flat = pl.pallas_call(
        _make_conv_block_kernel(nb, Lp, 1.0 / float(L), EPS),
        out_shape=jax.ShapeDtypeStruct((c_out, N * Lp), x.dtype),
        grid_spec=pltpu.PrefetchScalarGridSpec(
            num_scalar_prefetch=0,
            grid=(grid_len,),
            in_specs=[
                pl.BlockSpec((K, nb * Lp), lambda i: (0, i)),    # im2col columns
                pl.BlockSpec((c_out, K), lambda i: (0, 0)),      # weights (resident)
            ],
            out_specs=pl.BlockSpec((c_out, nb * Lp), lambda i: (0, i)),
        ),
        compiler_params=pltpu.CompilerParams(
            dimension_semantics=dim_sem,
            vmem_limit_bytes=vmem_limit),
        cost_estimate=cost,
    )(cols, w2)

    # lane-dense (C_out, N*Lp) -> strip lane padding -> NCHW (cheap XLA ops).
    out = out_flat.reshape(c_out, N, Lp)[:, :, :L]
    return out.reshape(c_out, N, H, W).transpose(1, 0, 2, 3)


def conv_block_ref(x, w, b, *, padding=1):
    """Pure-JAX reference (mirrors PyTorch Conv2d + InstanceNorm2d + ReLU)."""
    y = lax.conv_general_dilated(
        x, w, window_strides=(1, 1),
        padding=[(padding, padding), (padding, padding)],
        dimension_numbers=("NCHW", "OIHW", "NCHW"))
    y = y + b[None, :, None, None]
    mean = y.mean(axis=(2, 3), keepdims=True)
    var = ((y - mean) ** 2).mean(axis=(2, 3), keepdims=True)
    y = (y - mean) / jnp.sqrt(var + EPS)
    return jnp.maximum(y, 0.0)


if __name__ == "__main__":
    N, C_IN, C_OUT, H, W, KS = 2, 4, 8, 16, 16, 3

    key = jax.random.PRNGKey(0)
    kx, kw, kb = jax.random.split(key, 3)

    x = jax.random.normal(kx, (N, C_IN, H, W), dtype=jnp.float32)
    # Deterministic Conv2d-style init (uniform with fan_in scaling).
    fan_in = C_IN * KS * KS
    bound = 1.0 / (fan_in ** 0.5)
    w = jax.random.uniform(kw, (C_OUT, C_IN, KS, KS), jnp.float32, -bound, bound)
    b = jax.random.uniform(kb, (C_OUT,), jnp.float32, -bound, bound)

    ref = conv_block_ref(x, w, b, padding=1)

    # f32 operand path: exact-ish match against the reference.
    out_f32 = conv_block(x, w, b, padding=1, compute_dtype=jnp.float32)
    out_f32 = jax.block_until_ready(out_f32)
    assert out_f32.shape == (N, C_OUT, H, W)
    assert jnp.allclose(out_f32, ref, atol=1e-4, rtol=1e-4), "f32 mismatch vs reference"

    # Default bf16-operand path (f32 accumulation + f32 norm math): relaxed tol.
    out_bf16 = conv_block(x, w, b, padding=1)
    out_bf16 = jax.block_until_ready(out_bf16)
    assert out_bf16.shape == (N, C_OUT, H, W)
    assert jnp.allclose(out_bf16, ref, atol=1e-1, rtol=1e-1), "bf16 mismatch vs reference"

    print("KERNEL_OK")
</pallas_src>

<mosaic_0001>
module attributes {stable_mosaic.version = 11 : i64} {
  func.func @kernel(%arg0: i32, %arg1: memref<36x512xf32, #tpu.memory_space<vmem>>, %arg2: memref<8x36xf32, #tpu.memory_space<vmem>>, %arg3: memref<8x512xf32, #tpu.memory_space<vmem>>) attributes {dimension_semantics = [#tpu.dimension_semantics<arbitrary>], iteration_bounds = array<i64: 1>, scalar_prefetch = 0 : i64, scratch_operands = 0 : i64, tpu.core_type = #tpu.core_type<tc>, window_params = [{transform_indices = @transform_0, window_bounds = array<i64: 36, 512>}, {pipeline_mode = #tpu.pipeline_mode<synchronous>, transform_indices = @transform_1, window_bounds = array<i64: 8, 36>}, {transform_indices = @transform_2, window_bounds = array<i64: 8, 512>}]} {
    %c0 = arith.constant 0 : index
    %c0_0 = arith.constant 0 : index
    %0 = vector.load %arg2[%c0, %c0_0] : memref<8x36xf32, #tpu.memory_space<vmem>>, vector<8x36xf32>
    %c0_1 = arith.constant 0 : index
    %c0_2 = arith.constant 0 : index
    %1 = vector.load %arg1[%c0_1, %c0_2] : memref<36x512xf32, #tpu.memory_space<vmem>>, vector<36x512xf32>
    %cst = arith.constant dense<0.000000e+00> : vector<8x512xf32>
    %2 = tpu.matmul %0, %1, %cst {dimension_numbers = #tpu.dot_dimension_numbers<[1], [0], [0], [1], [0, 0, 1, 1], [], []>} : vector<8x36xf32>, vector<36x512xf32>, vector<8x512xf32> -> vector<8x512xf32>
    %3 = vector.extract_strided_slice %2 {offsets = [0, 0], sizes = [8, 256], strides = [1, 1]} : vector<8x512xf32> to vector<8x256xf32>
    %cst_3 = arith.constant dense<0.000000e+00> : vector<8xf32>
    %4 = vector.multi_reduction <add>, %3, %cst_3 [1] : vector<8x256xf32> to vector<8xf32>
    %5 = vector.shape_cast %4 : vector<8xf32> to vector<8x1xf32>
    %6 = arith.mulf %3, %3 : vector<8x256xf32>
    %cst_4 = arith.constant dense<0.000000e+00> : vector<8xf32>
    %7 = vector.multi_reduction <add>, %6, %cst_4 [1] : vector<8x256xf32> to vector<8xf32>
    %8 = vector.shape_cast %7 : vector<8xf32> to vector<8x1xf32>
    %cst_5 = arith.constant 3.906250e-03 : f32
    %9 = vector.broadcast %cst_5 : f32 to vector<8x1xf32>
    %10 = arith.mulf %5, %9 : vector<8x1xf32>
    %cst_6 = arith.constant 3.906250e-03 : f32
    %11 = vector.broadcast %cst_6 : f32 to vector<8x1xf32>
    %12 = arith.mulf %8, %11 : vector<8x1xf32>
    %13 = arith.mulf %10, %10 : vector<8x1xf32>
    %14 = arith.subf %12, %13 : vector<8x1xf32>
    %cst_7 = arith.constant 0.000000e+00 : f32
    %15 = vector.broadcast %cst_7 : f32 to vector<8x1xf32>
    %16 = arith.maximumf %14, %15 : vector<8x1xf32>
    %17 = vector.broadcast %10 : vector<8x1xf32> to vector<8x256xf32>
    %18 = arith.subf %3, %17 : vector<8x256xf32>
    %cst_8 = arith.constant 9.99999974E-6 : f32
    %19 = vector.broadcast %cst_8 : f32 to vector<8x1xf32>
    %20 = arith.addf %16, %19 : vector<8x1xf32>
    %21 = math.rsqrt %20 : vector<8x1xf32>
    %22 = vector.broadcast %21 : vector<8x1xf32> to vector<8x256xf32>
    %23 = arith.mulf %18, %22 : vector<8x256xf32>
    %cst_9 = arith.constant 0.000000e+00 : f32
    %24 = vector.broadcast %cst_9 : f32 to vector<8x256xf32>
    %25 = arith.maximumf %23, %24 : vector<8x256xf32>
    %c0_10 = arith.constant 0 : index
    %c0_11 = arith.constant 0 : index
    %26 = vector.load %arg3[%c0_10, %c0_11] : memref<8x512xf32, #tpu.memory_space<vmem>>, vector<8x256xf32>
    tpu.vector_store %arg3[%c0_10, %c0_11], %25 {strides = array<i32>} : memref<8x512xf32, #tpu.memory_space<vmem>>, vector<8x256xf32>,
    %27 = vector.extract_strided_slice %2 {offsets = [0, 256], sizes = [8, 256], strides = [1, 1]} : vector<8x512xf32> to vector<8x256xf32>
    %cst_12 = arith.constant dense<0.000000e+00> : vector<8xf32>
    %28 = vector.multi_reduction <add>, %27, %cst_12 [1] : vector<8x256xf32> to vector<8xf32>
    %29 = vector.shape_cast %28 : vector<8xf32> to vector<8x1xf32>
    %30 = arith.mulf %27, %27 : vector<8x256xf32>
    %cst_13 = arith.constant dense<0.000000e+00> : vector<8xf32>
    %31 = vector.multi_reduction <add>, %30, %cst_13 [1] : vector<8x256xf32> to vector<8xf32>
    %32 = vector.shape_cast %31 : vector<8xf32> to vector<8x1xf32>
    %cst_14 = arith.constant 3.906250e-03 : f32
    %33 = vector.broadcast %cst_14 : f32 to vector<8x1xf32>
    %34 = arith.mulf %29, %33 : vector<8x1xf32>
    %cst_15 = arith.constant 3.906250e-03 : f32
    %35 = vector.broadcast %cst_15 : f32 to vector<8x1xf32>
    %36 = arith.mulf %32, %35 : vector<8x1xf32>
    %37 = arith.mulf %34, %34 : vector<8x1xf32>
    %38 = arith.subf %36, %37 : vector<8x1xf32>
    %cst_16 = arith.constant 0.000000e+00 : f32
    %39 = vector.broadcast %cst_16 : f32 to vector<8x1xf32>
    %40 = arith.maximumf %38, %39 : vector<8x1xf32>
    %41 = vector.broadcast %34 : vector<8x1xf32> to vector<8x256xf32>
    %42 = arith.subf %27, %41 : vector<8x256xf32>
    %cst_17 = arith.constant 9.99999974E-6 : f32
    %43 = vector.broadcast %cst_17 : f32 to vector<8x1xf32>
    %44 = arith.addf %40, %43 : vector<8x1xf32>
    %45 = math.rsqrt %44 : vector<8x1xf32>
    %46 = vector.broadcast %45 : vector<8x1xf32> to vector<8x256xf32>
    %47 = arith.mulf %42, %46 : vector<8x256xf32>
    %cst_18 = arith.constant 0.000000e+00 : f32
    %48 = vector.broadcast %cst_18 : f32 to vector<8x256xf32>
    %49 = arith.maximumf %47, %48 : vector<8x256xf32>
    %c0_19 = arith.constant 0 : index
    %c256 = arith.constant 256 : index
    %50 = vector.load %arg3[%c0_19, %c256] : memref<8x512xf32, #tpu.memory_space<vmem>>, vector<8x256xf32>
    tpu.vector_store %arg3[%c0_19, %c256], %49 {strides = array<i32>} : memref<8x512xf32, #tpu.memory_space<vmem>>, vector<8x256xf32>,
    return
  }
  func.func @transform_0(%arg0: i32) -> (i32, i32) {
    %c0_i32 = arith.constant 0 : i32
    %c0_i32_0 = arith.constant 0 : i32
    return %c0_i32, %arg0 : i32, i32
  }
  func.func @transform_1(%arg0: i32) -> (i32, i32) {
    %c0_i32 = arith.constant 0 : i32
    %c0_i32_0 = arith.constant 0 : i32
    %c0_i32_1 = arith.constant 0 : i32
    return %c0_i32, %c0_i32_0 : i32, i32
  }
  func.func @transform_2(%arg0: i32) -> (i32, i32) {
    %c0_i32 = arith.constant 0 : i32
    %c0_i32_0 = arith.constant 0 : i32
    return %c0_i32, %arg0 : i32, i32
  }
}

</mosaic_0001>

<llo_original>
// kernel: tpu_custom_call.1
$region0: #{tpu_custom_call.1}
  #allocation0 [shape = 'u32[]', space=smem, size = 0x4, offset = 0x4, fixed_abs, tag = 'smem constant byte address 0x4 - core index']
  #allocation1 [shape = 'u32[144,128]{1,0:T(1,128)}', space=vmem, size = 0x12000, scoped, tag = 'internal scratch']
  %s0 = inlined_call_operand.hbm [shape: f32[36,512], index: 0, kind: input, shape index: {}]
  %s1 = inlined_call_operand.hbm [shape: f32[8,36], index: 1, kind: input, shape index: {}]
  %s2 = inlined_call_operand.hbm [shape: f32[8,512], index: 2, kind: output, shape index: {}]
  %s3 = sld [smem:[#allocation0]]
  $region26: #{tpu_custom_call.1} parent=0
    _
  %s5 = ssub.s32 1, %s3
  %s6 = scalar_select 0, %s5, %s3
  $region1: #{tpu_custom_call.1} parent=0
    #allocation2 [shape = 'u8[81920]{0}', space=vmem, size = 0x14000, scoped, tag = 'input window, operand 0, single buffered']
    #allocation3 [shape = 's32[1]{0}', space=sflag, size = 0x4, scoped, tag = 'scoped memory for tpu_custom_call.1']
    #allocation4 [shape = 's32[1]{0}', space=sflag, size = 0x4, scoped, tag = 'scoped memory for tpu_custom_call.1']
    #allocation5 [shape = 'u8[4096]{0}', space=vmem, size = 0x1000, scoped, tag = 'input window, operand 1, single buffered']
    #allocation6 [shape = 's32[1]{0}', space=sflag, size = 0x4, scoped, tag = 'scoped memory for tpu_custom_call.1']
    #allocation7 [shape = 'u8[16384]{0}', space=vmem, size = 0x4000, scoped, tag = 'output window, operand 0, single buffered']
    %7 = vsyncpa [#allocation3], 0
    %8 = vsyncpa [#allocation6], 0
    %9 = vsyncpa [#allocation4], 0
    // Predicated region
    $region2: #{tpu_custom_call.1} parent=1 // pred_check
      _
    $region3: #{tpu_custom_call.1} parent=1 // pred_check_branch
      %11 = sbr.rel (0) target = $region5
    $region4: #{tpu_custom_call.1} parent=1 // pred_region
      %s13 = ssub.s32 2560, 2560
      %14 = vsyncadd [#allocation3], %s13
      %s15 = sshll.u32 [#allocation2], 4
      %s16 = int_to_ptr.vmem [resolvable:$true] %s15
      %21 = dma.hbm_to_vmem [thread:$0]  %s0, 2560, %s16, [#allocation3], 512, 512, 32
    $region5: #{tpu_custom_call.1} parent=1 // pred_fallthru
      _
    // Predicated region
    $region6: #{tpu_custom_call.1} parent=1 // pred_check
      _
    $region7: #{tpu_custom_call.1} parent=1 // pred_check_branch
      %23 = sbr.rel (0) target = $region9
    $region8: #{tpu_custom_call.1} parent=1 // pred_region
      %s25 = ssub.s32 128, 128
      %26 = vsyncadd [#allocation6], %s25
      %s28 = sshll.u32 [#allocation5], 4
      %s29 = int_to_ptr.vmem [resolvable:$true] %s28
      %31 = dma.hbm_to_vmem [thread:$0]  %s1, 128, %s29, [#allocation6]
    $region9: #{tpu_custom_call.1} parent=1 // pred_fallthru
      _
    // Predicated region
    $region10: #{tpu_custom_call.1} parent=1 // pred_check
      _
    $region11: #{tpu_custom_call.1} parent=1 // pred_check_branch
      %33 = sbr.rel (0) target = $region13
    $region12: #{tpu_custom_call.1} parent=1 // pred_region
      %34 = dma.done [#allocation3], 2560
    $region13: #{tpu_custom_call.1} parent=1 // pred_fallthru
      _
    // Predicated region
    $region14: #{tpu_custom_call.1} parent=1 // pred_check
      _
    $region15: #{tpu_custom_call.1} parent=1 // pred_check_branch
      %36 = sbr.rel (0) target = $region17
    $region16: #{tpu_custom_call.1} parent=1 // pred_region
      %37 = dma.done [#allocation6], 128
    $region17: #{tpu_custom_call.1} parent=1 // pred_fallthru
      _
    %v38 = vld [vmem:[#allocation5] sm:$0xff]
    %v39 = vld [vmem:[#allocation2] sm:$0xff]
    %v40 = vld [vmem:[#allocation2 + $0x8] sm:$0xff]
    %v41 = vld [vmem:[#allocation2 + $0x10] sm:$0xff]
    %v42 = vld [vmem:[#allocation2 + $0x18] sm:$0xff]
    %v43 = vld [vmem:[#allocation2 + $0x20] sm:$0xff]
    %v44 = vld [vmem:[#allocation2 + $0x28] sm:$0xff]
    %v45 = vld [vmem:[#allocation2 + $0x30] sm:$0xff]
    %v46 = vld [vmem:[#allocation2 + $0x38] sm:$0xff]
    %v47 = vld [vmem:[#allocation2 + $0x40] sm:$0xff]
    %v48 = vld [vmem:[#allocation2 + $0x48] sm:$0xff]
    %v49 = vld [vmem:[#allocation2 + $0x50] sm:$0xff]
    %v50 = vld [vmem:[#allocation2 + $0x58] sm:$0xff]
    %v51 = vld [vmem:[#allocation2 + $0x60] sm:$0xff]
    %v52 = vld [vmem:[#allocation2 + $0x68] sm:$0xff]
    %v53 = vld [vmem:[#allocation2 + $0x70] sm:$0xff]
    %v54 = vld [vmem:[#allocation2 + $0x78] sm:$0xff]
    %v55 = vld [vmem:[#allocation2 + $0x80] sm:$0xf]
    %v56 = vld [vmem:[#allocation2 + $0x88] sm:$0xf]
    %v57 = vld [vmem:[#allocation2 + $0x90] sm:$0xf]
    %v58 = vld [vmem:[#allocation2 + $0x98] sm:$0xf]
    %vm59 = vcmask 293888
    %v61 = vsel %vm59, %v38, 0
    %vm63 = vcmask 1043456
    %v65 = vsel %vm63, %v55, 0
    %v68 = vsel %vm63, %v56, 0
    %v71 = vsel %vm63, %v57, 0
    %v74 = vsel %vm63, %v58, 0
    %76 = vmatprep.subr.mxu0 %v40
    %77 = vmatpush1.msra.mxu0 %v39
    %78 = vmatprep.subr.mxu0 %v44
    %79 = vmatpush1.msra.mxu0 %v43
    %80 = vmatprep.subr.mxu0 %v48
    %81 = vmatpush1.msra.mxu0 %v47
    %82 = vmatprep.subr.mxu0 %v52
    %83 = vmatpush1.msra.mxu0 %v51
    %84 = vmatprep.subr.mxu0 %v68
    %85 = vmatpush1.msra.mxu0 %v65
    %86 = vmatprep.subr.mxu0 0.0
    %87 = vmatpush1.msra.mxu0 0.0
    %88 = vmatprep.subr.mxu0 0.0
    %89 = vmatpush1.msra.mxu0 0.0
    %90 = vmatprep.subr.mxu0 0.0
    %91 = vmatpush1.msra.mxu0 0.0
    %92 = vmatprep.subr.mxu0 0.0
    %93 = vmatpush1.msra.mxu0 0.0
    %94 = vmatprep.subr.mxu0 0.0
    %95 = vmatpush1.msra.mxu0 0.0
    %96 = vmatprep.subr.mxu0 0.0
    %97 = vmatpush1.msra.mxu0 0.0
    %98 = vmatprep.subr.mxu0 0.0
    %99 = vmatpush1.msra.mxu0 0.0
    %100 = vmatprep.subr.mxu0 0.0
    %101 = vmatpush1.msra.mxu0 0.0
    %102 = vmatprep.subr.mxu0 0.0
    %103 = vmatpush1.msra.mxu0 0.0
    %104 = vmatprep.subr.mxu0 0.0
    %105 = vmatpush1.msra.mxu0 0.0
    %106 = vmatprep.subr.mxu0 0.0
    %107 = vmatpush1.msra.mxu0 0.0
    %108 = vmatprep.subr.mxu0 0.0
    %109 = vmatpush1.msra.mxu0 0.0
    %110 = vmatprep.subr.mxu0 0.0
    %111 = vmatpush1.msra.mxu0 0.0
    %112 = vmatprep.subr.mxu0 0.0
    %113 = vmatpush1.msra.mxu0 0.0
    %114 = vmatprep.subr.mxu0 0.0
    %115 = vmatpush1.msra.mxu0 0.0
    %116 = vmatprep.subr.mxu0 0.0
    %117 = vmatpush1.msra.mxu0 0.0
    %118 = vmatprep.subr.mxu0 0.0
    %119 = vmatpush1.msra.mxu0 0.0
    %120 = vmatprep.subr.mxu0 0.0
    %121 = vmatpush1.msra.mxu0 0.0
    %122 = vmatprep.subr.mxu0 0.0
    %123 = vmatpush1.msra.mxu0 0.0
    %124 = vmatprep.subr.mxu0 0.0
    %125 = vmatpush1.msra.mxu0 0.0
    %126 = vmatprep.subr.mxu0 0.0
    %127 = vmatpush1.msra.mxu0 0.0
    %128 = vmatprep.subr.mxu0 0.0
    %129 = vmatpush1.msra.mxu0 0.0
    %130 = vmatprep.subr.mxu0 0.0
    %131 = vmatpush1.msra.mxu0 0.0
    %132 = vmatprep.subr.mxu0 0.0
    %133 = vmatpush1.msra.mxu0 0.0
    %134 = vmatprep.subr.mxu0 0.0
    %135 = vmatpush1.msra.mxu0 0.0
    %136 = vmatprep.subr.mxu0 0.0
    %137 = vmatpush1.msra.mxu0 0.0
    %138 = vmatprep.subr.mxu0 0.0
    %139 = vmatpush1.msra.mxu0 0.0
    %140 = vmatprep.mubr.f32.mxu0 0.0
    %141 = vmatmul.mubr.f32.gmra.mrb[0].mxu0 %v61
    %v142 = vpop.f32.mrb[0].mxu0
    %v143 = vadd.f32 0.0, %v142
    %v144 = vpop.f32.mrb[0].mxu0
    %v145 = vadd.f32 0.0, %v144
    %146 = vdwg.mxu0
    %147 = vmatprep.subr.mxu0 %v42
    %148 = vmatpush1.msra.mxu0 %v41
    %149 = vmatprep.subr.mxu0 %v46
    %150 = vmatpush1.msra.mxu0 %v45
    %151 = vmatprep.subr.mxu0 %v50
    %152 = vmatpush1.msra.mxu0 %v49
    %153 = vmatprep.subr.mxu0 %v54
    %154 = vmatpush1.msra.mxu0 %v53
    %155 = vmatprep.subr.mxu0 %v74
    %156 = vmatpush1.msra.mxu0 %v71
    %157 = vmatprep.subr.mxu0 0.0
    %158 = vmatpush1.msra.mxu0 0.0
    %159 = vmatprep.subr.mxu0 0.0
    %160 = vmatpush1.msra.mxu0 0.0
    %161 = vmatprep.subr.mxu0 0.0
    %162 = vmatpush1.msra.mxu0 0.0
    %163 = vmatprep.subr.mxu0 0.0
    %164 = vmatpush1.msra.mxu0 0.0
    %165 = vmatprep.subr.mxu0 0.0
    %166 = vmatpush1.msra.mxu0 0.0
    %167 = vmatprep.subr.mxu0 0.0
    %168 = vmatpush1.msra.mxu0 0.0
    %169 = vmatprep.subr.mxu0 0.0
    %170 = vmatpush1.msra.mxu0 0.0
    %171 = vmatprep.subr.mxu0 0.0
    %172 = vmatpush1.msra.mxu0 0.0
    %173 = vmatprep.subr.mxu0 0.0
    %174 = vmatpush1.msra.mxu0 0.0
    %175 = vmatprep.subr.mxu0 0.0
    %176 = vmatpush1.msra.mxu0 0.0
    %177 = vmatprep.subr.mxu0 0.0
    %178 = vmatpush1.msra.mxu0 0.0
    %179 = vmatprep.subr.mxu0 0.0
    %180 = vmatpush1.msra.mxu0 0.0
    %181 = vmatprep.subr.mxu0 0.0
    %182 = vmatpush1.msra.mxu0 0.0
    %183 = vmatprep.subr.mxu0 0.0
    %184 = vmatpush1.msra.mxu0 0.0
    %185 = vmatprep.subr.mxu0 0.0
    %186 = vmatpush1.msra.mxu0 0.0
    %187 = vmatprep.subr.mxu0 0.0
    %188 = vmatpush1.msra.mxu0 0.0
    %189 = vmatprep.subr.mxu0 0.0
    %190 = vmatpush1.msra.mxu0 0.0
    %191 = vmatprep.subr.mxu0 0.0
    %192 = vmatpush1.msra.mxu0 0.0
    %193 = vmatprep.subr.mxu0 0.0
    %194 = vmatpush1.msra.mxu0 0.0
    %195 = vmatprep.subr.mxu0 0.0
    %196 = vmatpush1.msra.mxu0 0.0
    %197 = vmatprep.subr.mxu0 0.0
    %198 = vmatpush1.msra.mxu0 0.0
    %199 = vmatprep.subr.mxu0 0.0
    %200 = vmatpush1.msra.mxu0 0.0
    %201 = vmatprep.subr.mxu0 0.0
    %202 = vmatpush1.msra.mxu0 0.0
    %203 = vmatprep.subr.mxu0 0.0
    %204 = vmatpush1.msra.mxu0 0.0
    %205 = vmatprep.subr.mxu0 0.0
    %206 = vmatpush1.msra.mxu0 0.0
    %207 = vmatprep.subr.mxu0 0.0
    %208 = vmatpush1.msra.mxu0 0.0
    %209 = vmatprep.subr.mxu0 0.0
    %210 = vmatpush1.msra.mxu0 0.0
    %211 = vmatprep.mubr.f32.mxu0 0.0
    %212 = vmatmul.mubr.f32.gmra.mrb[0].mxu0 %v61
    %v213 = vpop.f32.mrb[0].mxu0
    %v214 = vadd.f32 0.0, %v213
    %v215 = vpop.f32.mrb[0].mxu0
    %v216 = vadd.f32 0.0, %v215
    %217 = vdwg.mxu0
    %v218 = vadd.f32 %v143, %v145
    %219 = vadd.xlane.f32.xlu0 %v218
    %v220 = vpop.xlane.xlu0 %219
    %v221 = vmul.f32 %v143, %v143
    %v222 = vmul.f32 %v145, %v145
    %v223 = vadd.f32 %v221, %v222
    %224 = vadd.xlane.f32.xlu0 %v223
    %v225 = vpop.xlane.xlu0 %224
    %v226 = vmul.f32 %v220, 0.00390625
    %v227 = vmul.f32 %v225, 0.00390625
    %v228 = vmul.f32 %v226, %v226
    %v229 = vsub.f32 %v227, %v228
    %v230 = vmax.f32 %v229, 0.0
    %v231 = vsub.f32 %v143, %v226
    %v232 = vsub.f32 %v145, %v226
    %v233 = vadd.f32 %v230, 1e-05
    %v234 = vrsqrt.pop %v233
    %v235 = vmul.f32 %v231, %v234
    %v236 = vmul.f32 %v232, %v234
    %v237 = vmax.f32 %v235, 0.0
    %v238 = vmax.f32 %v236, 0.0
    %239 = vst [vmem:[#allocation7] sm:$0xff] %v237
    %240 = vst [vmem:[#allocation7 + $0x8] sm:$0xff] %v238
    %v241 = vadd.f32 %v214, %v216
    %242 = vadd.xlane.f32.xlu0 %v241
    %v243 = vpop.xlane.xlu0 %242
    %v244 = vmul.f32 %v214, %v214
    %v245 = vmul.f32 %v216, %v216
    %v246 = vadd.f32 %v244, %v245
    %247 = vadd.xlane.f32.xlu0 %v246
    %v248 = vpop.xlane.xlu0 %247
    %v249 = vmul.f32 %v243, 0.00390625
    %v250 = vmul.f32 %v248, 0.00390625
    %v251 = vmul.f32 %v249, %v249
    %v252 = vsub.f32 %v250, %v251
    %v253 = vmax.f32 %v252, 0.0
    %v254 = vsub.f32 %v214, %v249
    %v255 = vsub.f32 %v216, %v249
    %v256 = vadd.f32 %v253, 1e-05
    %v257 = vrsqrt.pop %v256
    %v258 = vmul.f32 %v254, %v257
    %v259 = vmul.f32 %v255, %v257
    %v260 = vmax.f32 %v258, 0.0
    %v261 = vmax.f32 %v259, 0.0
    %262 = vst [vmem:[#allocation7 + $0x10] sm:$0xff] %v260
    %263 = vst [vmem:[#allocation7 + $0x18] sm:$0xff] %v261
    // Predicated region
    $region18: #{tpu_custom_call.1} parent=1 // pred_check
      _
    $region19: #{tpu_custom_call.1} parent=1 // pred_check_branch
      %265 = sbr.rel (0) target = $region21
    $region20: #{tpu_custom_call.1} parent=1 // pred_region
      %s267 = ssub.s32 512, 512
      %268 = vsyncadd [#allocation4], %s267
      %s270 = sshll.u32 [#allocation7], 4
      %s271 = int_to_ptr.vmem [resolvable:$true] %s270
      %273 = dma.vmem_to_hbm [thread:$0]  %s271, 512, %s2, [#allocation4]
    $region21: #{tpu_custom_call.1} parent=1 // pred_fallthru
      _
    // Predicated region
    $region22: #{tpu_custom_call.1} parent=1 // pred_check
      _
    $region23: #{tpu_custom_call.1} parent=1 // pred_check_branch
      %275 = sbr.rel (0) target = $region25
    $region24: #{tpu_custom_call.1} parent=1 // pred_region
      %276 = dma.done [#allocation4], 512
    $region25: #{tpu_custom_call.1} parent=1 // pred_fallthru
      _
    %277 = vsyncpa [#allocation3], 1
    %278 = vsyncpa [#allocation6], 1
    %279 = vsyncpa [#allocation4], 1

</llo_original>
